<compile_context>
chip_gen: v7x
topology: tpu7x:2x2x1
jax: 0.10.0
libtpu: 0.0.40
codegen_flags: <defaults>
</compile_context>

<pallas_src>
import jax
import jax.numpy as jnp
from jax.experimental import pallas as pl
from jax.experimental.pallas import tpu as pltpu


def _round_up(n, m):
    return ((n + m - 1) // m) * m


def _cosine_qt_kernel(cq_ref, ct_ref, embT_ref, wq_ref, bq_ref, wt_ref, bt_ref,
                      o_ref):
    # Shapes (feature-major / batch-on-lanes layout):
    #   cq_ref/ct_ref: (Vp, TB)  token counts for this batch tile
    #   embT_ref:      (Dp, Vp)  embedding table, transposed (VMEM-resident)
    #   wq_ref/wt_ref: (Hp, Dp)  Linear weights in native PyTorch (out, in) layout
    #   bq_ref/bt_ref: (Hp, 1)
    #   o_ref:         (1, TB)   lane-dense prediction slab
    embT = embT_ref[...]

    # Fused embedding-gather + sequence-sum: one MXU matmul each.
    q_sum = jnp.dot(embT, cq_ref[...], preferred_element_type=jnp.float32)  # (Dp, TB)
    t_sum = jnp.dot(embT, ct_ref[...], preferred_element_type=jnp.float32)  # (Dp, TB)

    # query_hidden / title_hidden: tanh(W @ x + b)
    q = jnp.tanh(
        jnp.dot(wq_ref[...], q_sum, preferred_element_type=jnp.float32)
        + bq_ref[...])                                                      # (Hp, TB)
    t = jnp.tanh(
        jnp.dot(wt_ref[...], t_sum, preferred_element_type=jnp.float32)
        + bt_ref[...])                                                      # (Hp, TB)

    # Cosine similarity.  Reductions over the sublane (feature) axis leave the
    # per-example scalars on the lane (batch) axis -> lane-dense final store.
    w12 = jnp.sum(q * t, axis=0, keepdims=True)    # (1, TB)
    w1sq = jnp.sum(q * q, axis=0, keepdims=True)   # (1, TB)
    w2sq = jnp.sum(t * t, axis=0, keepdims=True)   # (1, TB)
    cos = w12 / (jnp.sqrt(w1sq * w2sq) + 1e-12)    # == w12/(||q||*||t|| + eps)
    o_ref[...] = (cos + 1.0) * 0.5                 # pred_score


def cosine_qt_forward(query_tokens, title_tokens, params, *, tb_max=256):
    """params: dict with 'emb' (V, D), 'wq' (H, D), 'bq' (H,), 'wt' (H, D), 'bt' (H,)."""
    emb = params["emb"]                       # (V, D)
    wq, bq = params["wq"], params["bq"]       # (H, D), (H,)
    wt, bt = params["wt"], params["bt"]
    V, D = emb.shape
    H = wq.shape[0]
    B = query_tokens.shape[0]

    # Pad feature dims to full vreg lanes / MXU width.
    Vp = _round_up(V, 128)
    Dp = _round_up(D, 128)
    Hp = _round_up(H, 128)

    # Batch tiling.  A single tile only needs to be a multiple of 8 (sublane /
    # validity of the lane block); multi-tile batches use 128-multiple tiles so
    # the lane-blocked inputs stay aligned.
    if B <= tb_max:
        TB = _round_up(max(B, 1), 8)
        B_pad = TB
    else:
        TB = tb_max                           # multiple of 128
        B_pad = _round_up(B, TB)
    grid = (B_pad // TB,)

    def _counts_t(tokens):
        # (Vp, B_pad) float token-count matrix.  emb.T @ counts is exactly the
        # gathered-embedding sequence sum (PAD row 0 of emb is zero, matching
        # nn.Embedding(padding_idx=PAD_IDX)); duplicate tokens accumulate.
        Bt, _ = tokens.shape
        c = jnp.zeros((Bt, Vp), jnp.float32)
        c = c.at[jnp.arange(Bt)[:, None], tokens].add(1.0)
        c = jnp.pad(c, ((0, B_pad - Bt), (0, 0)))
        return c.T                            # (Vp, B_pad)

    cq = _counts_t(query_tokens)
    ct = _counts_t(title_tokens)

    # Zero-pad table / weights / biases.  Padded hidden units produce
    # tanh(0) = 0, so they do not perturb the cosine.
    embT = jnp.pad(emb.T.astype(jnp.float32), ((0, Dp - D), (0, Vp - V)))   # (Dp, Vp)
    wq_p = jnp.pad(wq.astype(jnp.float32), ((0, Hp - H), (0, Dp - D)))      # (Hp, Dp)
    wt_p = jnp.pad(wt.astype(jnp.float32), ((0, Hp - H), (0, Dp - D)))      # (Hp, Dp)
    bq_p = jnp.pad(bq.astype(jnp.float32), (0, Hp - H)).reshape(Hp, 1)      # (Hp, 1)
    bt_p = jnp.pad(bt.astype(jnp.float32), (0, Hp - H)).reshape(Hp, 1)      # (Hp, 1)
    # TODO(synk): on v6e/v7x cast embT / wq_p / wt_p / counts to bfloat16 for the
    # matmuls (f32 accumulate, f32 tanh/cosine) to halve VMEM/HBM traffic; kept
    # f32 here so the toy check matches the PyTorch reference to 1e-5.

    out = pl.pallas_call(
        _cosine_qt_kernel,
        out_shape=jax.ShapeDtypeStruct((1, B_pad), jnp.float32),
        grid_spec=pltpu.PrefetchScalarGridSpec(
            num_scalar_prefetch=0,
            grid=grid,
            in_specs=[
                pl.BlockSpec((Vp, TB), lambda i: (0, i)),   # query counts tile
                pl.BlockSpec((Vp, TB), lambda i: (0, i)),   # title counts tile
                pl.BlockSpec((Dp, Vp), lambda i: (0, 0)),   # emb.T   (resident)
                pl.BlockSpec((Hp, Dp), lambda i: (0, 0)),   # Wq      (resident)
                pl.BlockSpec((Hp, 1), lambda i: (0, 0)),    # bq
                pl.BlockSpec((Hp, Dp), lambda i: (0, 0)),   # Wt      (resident)
                pl.BlockSpec((Hp, 1), lambda i: (0, 0)),    # bt
            ],
            out_specs=pl.BlockSpec((1, TB), lambda i: (0, i)),
        ),
        compiler_params=pltpu.CompilerParams(
            dimension_semantics=("parallel",),
        ),
    )(cq, ct, embT, wq_p, bq_p, wt_p, bt_p)

    return out[0, :B].reshape(B, 1)


def reference_forward(query_tokens, title_tokens, params):
    """Pure-JAX reference (mirrors the PyTorch module) for correctness checking."""
    emb = params["emb"]
    eq = jnp.take(emb, query_tokens, axis=0).sum(axis=1)
    et = jnp.take(emb, title_tokens, axis=0).sum(axis=1)
    q = jnp.tanh(eq @ params["wq"].T + params["bq"])
    t = jnp.tanh(et @ params["wt"].T + params["bt"])
    w12 = jnp.sum(q * t, axis=1)
    w1 = jnp.linalg.norm(q, axis=1)
    w2 = jnp.linalg.norm(t, axis=1)
    cos = (w12 / (w1 * w2 + 1e-12))[:, None]
    return (cos + 1.0) / 2.0


if __name__ == "__main__":
    # Small shapes consistent with the module's forward.
    B = 2            # batch
    Lq, Lt = 8, 8    # query / title sequence lengths
    D = 32           # word_embed_dim
    H = 32           # h1_size
    V = 50           # vocab size (len(dct))
    PAD_IDX = 0

    key = jax.random.PRNGKey(0)
    k_emb, k_wq, k_bq, k_wt, k_bt, k_qt, k_tt = jax.random.split(key, 7)

    emb = jax.random.normal(k_emb, (V, D), dtype=jnp.float32) * 0.1
    emb = emb.at[PAD_IDX].set(0.0)   # padding_idx row is zero
    params = {
        "emb": emb,
        "wq": jax.random.normal(k_wq, (H, D), dtype=jnp.float32) * 0.1,
        "bq": jax.random.normal(k_bq, (H,), dtype=jnp.float32) * 0.1,
        "wt": jax.random.normal(k_wt, (H, D), dtype=jnp.float32) * 0.1,
        "bt": jax.random.normal(k_bt, (H,), dtype=jnp.float32) * 0.1,
    }

    query_tokens = jax.random.randint(k_qt, (B, Lq), 0, V, dtype=jnp.int32)
    title_tokens = jax.random.randint(k_tt, (B, Lt), 0, V, dtype=jnp.int32)

    pred = cosine_qt_forward(query_tokens, title_tokens, params)
    pred = jax.block_until_ready(pred)

    ref = reference_forward(query_tokens, title_tokens, params)
    assert pred.shape == (B, 1)
    assert jnp.allclose(pred, ref, atol=1e-5, rtol=1e-5)

    print("KERNEL_OK")
</pallas_src>

<mosaic_0001>
module attributes {stable_mosaic.version = 11 : i64} {
  func.func @_cosine_qt_kernel(%arg0: i32, %arg1: memref<128x8xf32, #tpu.memory_space<vmem>>, %arg2: memref<128x8xf32, #tpu.memory_space<vmem>>, %arg3: memref<128x128xf32, #tpu.memory_space<vmem>>, %arg4: memref<128x128xf32, #tpu.memory_space<vmem>>, %arg5: memref<128x1xf32, #tpu.memory_space<vmem>>, %arg6: memref<128x128xf32, #tpu.memory_space<vmem>>, %arg7: memref<128x1xf32, #tpu.memory_space<vmem>>, %arg8: memref<1x8xf32, #tpu.memory_space<vmem>>) attributes {dimension_semantics = [#tpu.dimension_semantics<parallel>], iteration_bounds = array<i64: 1>, scalar_prefetch = 0 : i64, scratch_operands = 0 : i64, tpu.core_type = #tpu.core_type<tc>, window_params = [{transform_indices = @transform_0, window_bounds = array<i64: 128, 8>}, {transform_indices = @transform_1, window_bounds = array<i64: 128, 8>}, {pipeline_mode = #tpu.pipeline_mode<synchronous>, transform_indices = @transform_2, window_bounds = array<i64: 128, 128>}, {pipeline_mode = #tpu.pipeline_mode<synchronous>, transform_indices = @transform_3, window_bounds = array<i64: 128, 128>}, {pipeline_mode = #tpu.pipeline_mode<synchronous>, transform_indices = @transform_4, window_bounds = array<i64: 128, 1>}, {pipeline_mode = #tpu.pipeline_mode<synchronous>, transform_indices = @transform_5, window_bounds = array<i64: 128, 128>}, {pipeline_mode = #tpu.pipeline_mode<synchronous>, transform_indices = @transform_6, window_bounds = array<i64: 128, 1>}, {transform_indices = @transform_7, window_bounds = array<i64: 1, 8>}]} {
    %c0 = arith.constant 0 : index
    %c0_0 = arith.constant 0 : index
    %0 = vector.load %arg3[%c0, %c0_0] : memref<128x128xf32, #tpu.memory_space<vmem>>, vector<128x128xf32>
    %c0_1 = arith.constant 0 : index
    %c0_2 = arith.constant 0 : index
    %1 = vector.load %arg1[%c0_1, %c0_2] : memref<128x8xf32, #tpu.memory_space<vmem>>, vector<128x8xf32>
    %cst = arith.constant dense<0.000000e+00> : vector<128x8xf32>
    %2 = tpu.matmul %0, %1, %cst {dimension_numbers = #tpu.dot_dimension_numbers<[1], [0], [0], [1], [0, 0, 1, 1], [], []>} : vector<128x128xf32>, vector<128x8xf32>, vector<128x8xf32> -> vector<128x8xf32>
    %c0_3 = arith.constant 0 : index
    %c0_4 = arith.constant 0 : index
    %3 = vector.load %arg2[%c0_3, %c0_4] : memref<128x8xf32, #tpu.memory_space<vmem>>, vector<128x8xf32>
    %cst_5 = arith.constant dense<0.000000e+00> : vector<128x8xf32>
    %4 = tpu.matmul %0, %3, %cst_5 {dimension_numbers = #tpu.dot_dimension_numbers<[1], [0], [0], [1], [0, 0, 1, 1], [], []>} : vector<128x128xf32>, vector<128x8xf32>, vector<128x8xf32> -> vector<128x8xf32>
    %c0_6 = arith.constant 0 : index
    %c0_7 = arith.constant 0 : index
    %5 = vector.load %arg4[%c0_6, %c0_7] : memref<128x128xf32, #tpu.memory_space<vmem>>, vector<128x128xf32>
    %cst_8 = arith.constant dense<0.000000e+00> : vector<128x8xf32>
    %6 = tpu.matmul %5, %2, %cst_8 {dimension_numbers = #tpu.dot_dimension_numbers<[1], [0], [0], [1], [0, 0, 1, 1], [], []>} : vector<128x128xf32>, vector<128x8xf32>, vector<128x8xf32> -> vector<128x8xf32>
    %c0_9 = arith.constant 0 : index
    %c0_10 = arith.constant 0 : index
    %7 = vector.load %arg5[%c0_9, %c0_10] : memref<128x1xf32, #tpu.memory_space<vmem>>, vector<128x1xf32>
    %8 = vector.broadcast %7 : vector<128x1xf32> to vector<128x8xf32>
    %9 = arith.addf %6, %8 : vector<128x8xf32>
    %10 = math.tanh %9 : vector<128x8xf32>
    %c0_11 = arith.constant 0 : index
    %c0_12 = arith.constant 0 : index
    %11 = vector.load %arg6[%c0_11, %c0_12] : memref<128x128xf32, #tpu.memory_space<vmem>>, vector<128x128xf32>
    %cst_13 = arith.constant dense<0.000000e+00> : vector<128x8xf32>
    %12 = tpu.matmul %11, %4, %cst_13 {dimension_numbers = #tpu.dot_dimension_numbers<[1], [0], [0], [1], [0, 0, 1, 1], [], []>} : vector<128x128xf32>, vector<128x8xf32>, vector<128x8xf32> -> vector<128x8xf32>
    %c0_14 = arith.constant 0 : index
    %c0_15 = arith.constant 0 : index
    %13 = vector.load %arg7[%c0_14, %c0_15] : memref<128x1xf32, #tpu.memory_space<vmem>>, vector<128x1xf32>
    %14 = vector.broadcast %13 : vector<128x1xf32> to vector<128x8xf32>
    %15 = arith.addf %12, %14 : vector<128x8xf32>
    %16 = math.tanh %15 : vector<128x8xf32>
    %17 = arith.mulf %10, %16 : vector<128x8xf32>
    %cst_16 = arith.constant dense<0.000000e+00> : vector<8xf32>
    %18 = vector.multi_reduction <add>, %17, %cst_16 [0] : vector<128x8xf32> to vector<8xf32>
    %19 = vector.shape_cast %18 : vector<8xf32> to vector<1x8xf32>
    %20 = arith.mulf %10, %10 : vector<128x8xf32>
    %cst_17 = arith.constant dense<0.000000e+00> : vector<8xf32>
    %21 = vector.multi_reduction <add>, %20, %cst_17 [0] : vector<128x8xf32> to vector<8xf32>
    %22 = vector.shape_cast %21 : vector<8xf32> to vector<1x8xf32>
    %23 = arith.mulf %16, %16 : vector<128x8xf32>
    %cst_18 = arith.constant dense<0.000000e+00> : vector<8xf32>
    %24 = vector.multi_reduction <add>, %23, %cst_18 [0] : vector<128x8xf32> to vector<8xf32>
    %25 = vector.shape_cast %24 : vector<8xf32> to vector<1x8xf32>
    %26 = arith.mulf %22, %25 : vector<1x8xf32>
    %27 = math.sqrt %26 : vector<1x8xf32>
    %cst_19 = arith.constant 9.99999996E-13 : f32
    %28 = vector.broadcast %cst_19 : f32 to vector<1x8xf32>
    %29 = arith.addf %27, %28 : vector<1x8xf32>
    %30 = arith.divf %19, %29 : vector<1x8xf32>
    %cst_20 = arith.constant 1.000000e+00 : f32
    %31 = vector.broadcast %cst_20 : f32 to vector<1x8xf32>
    %32 = arith.addf %30, %31 : vector<1x8xf32>
    %cst_21 = arith.constant 5.000000e-01 : f32
    %33 = vector.broadcast %cst_21 : f32 to vector<1x8xf32>
    %34 = arith.mulf %32, %33 : vector<1x8xf32>
    %c0_22 = arith.constant 0 : index
    %c0_23 = arith.constant 0 : index
    %35 = vector.load %arg8[%c0_22, %c0_23] : memref<1x8xf32, #tpu.memory_space<vmem>>, vector<1x8xf32>
    tpu.vector_store %arg8[%c0_22, %c0_23], %34 {strides = array<i32>} : memref<1x8xf32, #tpu.memory_space<vmem>>, vector<1x8xf32>,
    return
  }
  func.func @transform_0(%arg0: i32) -> (i32, i32) {
    %c0_i32 = arith.constant 0 : i32
    %c0_i32_0 = arith.constant 0 : i32
    return %c0_i32, %arg0 : i32, i32
  }
  func.func @transform_1(%arg0: i32) -> (i32, i32) {
    %c0_i32 = arith.constant 0 : i32
    %c0_i32_0 = arith.constant 0 : i32
    return %c0_i32, %arg0 : i32, i32
  }
  func.func @transform_2(%arg0: i32) -> (i32, i32) {
    %c0_i32 = arith.constant 0 : i32
    %c0_i32_0 = arith.constant 0 : i32
    %c0_i32_1 = arith.constant 0 : i32
    return %c0_i32, %c0_i32_0 : i32, i32
  }
  func.func @transform_3(%arg0: i32) -> (i32, i32) {
    %c0_i32 = arith.constant 0 : i32
    %c0_i32_0 = arith.constant 0 : i32
    %c0_i32_1 = arith.constant 0 : i32
    return %c0_i32, %c0_i32_0 : i32, i32
  }
  func.func @transform_4(%arg0: i32) -> (i32, i32) {
    %c0_i32 = arith.constant 0 : i32
    %c0_i32_0 = arith.constant 0 : i32
    %c0_i32_1 = arith.constant 0 : i32
    return %c0_i32, %c0_i32_0 : i32, i32
  }
  func.func @transform_5(%arg0: i32) -> (i32, i32) {
    %c0_i32 = arith.constant 0 : i32
    %c0_i32_0 = arith.constant 0 : i32
    %c0_i32_1 = arith.constant 0 : i32
    return %c0_i32, %c0_i32_0 : i32, i32
  }
  func.func @transform_6(%arg0: i32) -> (i32, i32) {
    %c0_i32 = arith.constant 0 : i32
    %c0_i32_0 = arith.constant 0 : i32
    %c0_i32_1 = arith.constant 0 : i32
    return %c0_i32, %c0_i32_0 : i32, i32
  }
  func.func @transform_7(%arg0: i32) -> (i32, i32) {
    %c0_i32 = arith.constant 0 : i32
    %c0_i32_0 = arith.constant 0 : i32
    return %c0_i32, %arg0 : i32, i32
  }
}

</mosaic_0001>

<llo_original>
// kernel: tpu_custom_call.1
$region0: #{tpu_custom_call.1}
  #allocation0 [shape = 'u32[]', space=smem, size = 0x4, offset = 0x4, fixed_abs, tag = 'smem constant byte address 0x4 - core index']
  #allocation1 [shape = 'u32[144,128]{1,0:T(1,128)}', space=vmem, size = 0x12000, scoped, tag = 'internal scratch']
  %s0 = inlined_call_operand.vmem [shape: f32[128,8], index: 0, kind: input, shape index: {}]
  %s1 = inlined_call_operand.vmem [shape: f32[128,8], index: 1, kind: input, shape index: {}]
  %s2 = inlined_call_operand.vmem [shape: f32[128,128], index: 2, kind: input, shape index: {}]
  %s3 = inlined_call_operand.vmem [shape: f32[128,128], index: 3, kind: input, shape index: {}]
  %s4 = inlined_call_operand.vmem [shape: f32[128,1], index: 4, kind: input, shape index: {}]
  %s5 = inlined_call_operand.vmem [shape: f32[128,128], index: 5, kind: input, shape index: {}]
  %s6 = inlined_call_operand.vmem [shape: f32[128,1], index: 6, kind: input, shape index: {}]
  %s7 = inlined_call_operand.hbm [shape: f32[1,8], index: 7, kind: output, shape index: {}]
  %s8 = sld [smem:[#allocation0]]
  $region38: #{tpu_custom_call.1} parent=0
    _
  %s10 = ssub.s32 1, %s8
  %s11 = scalar_select 0, %s10, %s8
  $region1: #{tpu_custom_call.1} parent=0
    #allocation2 [shape = 'u8[512]{0}', space=vmem, size = 0x400, scoped, tag = 'output window, operand 0, single buffered']
    #allocation3 [shape = 's32[1]{0}', space=sflag, size = 0x4, scoped, tag = 'scoped memory for tpu_custom_call.1']
    %12 = vsyncpa [#allocation3], 0
    // Predicated region
    $region2: #{tpu_custom_call.1} parent=1 // pred_check
      _
    $region3: #{tpu_custom_call.1} parent=1 // pred_check_branch
      %14 = sbr.rel (0) target = $region5
    $region4: #{tpu_custom_call.1} parent=1 // pred_region
      _
    $region5: #{tpu_custom_call.1} parent=1 // pred_fallthru
      _
    // Predicated region
    $region6: #{tpu_custom_call.1} parent=1 // pred_check
      _
    $region7: #{tpu_custom_call.1} parent=1 // pred_check_branch
      %16 = sbr.rel (0) target = $region9
    $region8: #{tpu_custom_call.1} parent=1 // pred_region
      _
    $region9: #{tpu_custom_call.1} parent=1 // pred_fallthru
      _
    // Predicated region
    $region10: #{tpu_custom_call.1} parent=1 // pred_check
      _
    $region11: #{tpu_custom_call.1} parent=1 // pred_check_branch
      %18 = sbr.rel (0) target = $region13
    $region12: #{tpu_custom_call.1} parent=1 // pred_region
      _
    $region13: #{tpu_custom_call.1} parent=1 // pred_fallthru
      _
    // Predicated region
    $region14: #{tpu_custom_call.1} parent=1 // pred_check
      _
    $region15: #{tpu_custom_call.1} parent=1 // pred_check_branch
      %20 = sbr.rel (0) target = $region17
    $region16: #{tpu_custom_call.1} parent=1 // pred_region
      _
    $region17: #{tpu_custom_call.1} parent=1 // pred_fallthru
      _
    // Predicated region
    $region18: #{tpu_custom_call.1} parent=1 // pred_check
      _
    $region19: #{tpu_custom_call.1} parent=1 // pred_check_branch
      %22 = sbr.rel (0) target = $region21
    $region20: #{tpu_custom_call.1} parent=1 // pred_region
      _
    $region21: #{tpu_custom_call.1} parent=1 // pred_fallthru
      _
    // Predicated region
    $region22: #{tpu_custom_call.1} parent=1 // pred_check
      _
    $region23: #{tpu_custom_call.1} parent=1 // pred_check_branch
      %24 = sbr.rel (0) target = $region25
    $region24: #{tpu_custom_call.1} parent=1 // pred_region
      _
    $region25: #{tpu_custom_call.1} parent=1 // pred_fallthru
      _
    // Predicated region
    $region26: #{tpu_custom_call.1} parent=1 // pred_check
      _
    $region27: #{tpu_custom_call.1} parent=1 // pred_check_branch
      %26 = sbr.rel (0) target = $region29
    $region28: #{tpu_custom_call.1} parent=1 // pred_region
      _
    $region29: #{tpu_custom_call.1} parent=1 // pred_fallthru
      _
    %v27 = vld [vmem:[%s2] sm:$0xff]
    %v28 = vld [vmem:[%s2 + $0x8] sm:$0xff]
    %v29 = vld [vmem:[%s2 + $0x10] sm:$0xff]
    %v30 = vld [vmem:[%s2 + $0x18] sm:$0xff]
    %v31 = vld [vmem:[%s2 + $0x20] sm:$0xff]
    %v32 = vld [vmem:[%s2 + $0x28] sm:$0xff]
    %v33 = vld [vmem:[%s2 + $0x30] sm:$0xff]
    %v34 = vld [vmem:[%s2 + $0x38] sm:$0xff]
    %v35 = vld [vmem:[%s2 + $0x40] sm:$0xff]
    %v36 = vld [vmem:[%s2 + $0x48] sm:$0xff]
    %v37 = vld [vmem:[%s2 + $0x50] sm:$0xff]
    %v38 = vld [vmem:[%s2 + $0x58] sm:$0xff]
    %v39 = vld [vmem:[%s2 + $0x60] sm:$0xff]
    %v40 = vld [vmem:[%s2 + $0x68] sm:$0xff]
    %v41 = vld [vmem:[%s2 + $0x70] sm:$0xff]
    %v42 = vld [vmem:[%s2 + $0x78] sm:$0xff]
    %v43 = vld [vmem:[%s0] sm:$0xff]
    %v44 = vld [vmem:[%s0 + $0x8] sm:$0xff]
    %v45 = vld [vmem:[%s0 + $0x10] sm:$0xff]
    %v46 = vld [vmem:[%s0 + $0x18] sm:$0xff]
    %v47 = vld [vmem:[%s0 + $0x20] sm:$0xff]
    %v48 = vld [vmem:[%s0 + $0x28] sm:$0xff]
    %v49 = vld [vmem:[%s0 + $0x30] sm:$0xff]
    %v50 = vld [vmem:[%s0 + $0x38] sm:$0xff]
    %v51 = vld [vmem:[%s0 + $0x40] sm:$0xff]
    %v52 = vld [vmem:[%s0 + $0x48] sm:$0xff]
    %v53 = vld [vmem:[%s0 + $0x50] sm:$0xff]
    %v54 = vld [vmem:[%s0 + $0x58] sm:$0xff]
    %v55 = vld [vmem:[%s0 + $0x60] sm:$0xff]
    %v56 = vld [vmem:[%s0 + $0x68] sm:$0xff]
    %v57 = vld [vmem:[%s0 + $0x70] sm:$0xff]
    %v58 = vld [vmem:[%s0 + $0x78] sm:$0xff]
    %59 = vmatprep.subr.mxu0 0.0
    %60 = vmatpush1.msra.mxu0 %v43
    %61 = vmatprep.subr.mxu0 0.0
    %62 = vmatpush1.msra.mxu0 %v44
    %63 = vmatprep.subr.mxu0 0.0
    %64 = vmatpush1.msra.mxu0 %v45
    %65 = vmatprep.subr.mxu0 0.0
    %66 = vmatpush1.msra.mxu0 %v46
    %67 = vmatprep.subr.mxu0 0.0
    %68 = vmatpush1.msra.mxu0 %v47
    %69 = vmatprep.subr.mxu0 0.0
    %70 = vmatpush1.msra.mxu0 %v48
    %71 = vmatprep.subr.mxu0 0.0
    %72 = vmatpush1.msra.mxu0 %v49
    %73 = vmatprep.subr.mxu0 0.0
    %74 = vmatpush1.msra.mxu0 %v50
    %75 = vmatprep.subr.mxu0 0.0
    %76 = vmatpush1.msra.mxu0 %v51
    %77 = vmatprep.subr.mxu0 0.0
    %78 = vmatpush1.msra.mxu0 %v52
    %79 = vmatprep.subr.mxu0 0.0
    %80 = vmatpush1.msra.mxu0 %v53
    %81 = vmatprep.subr.mxu0 0.0
    %82 = vmatpush1.msra.mxu0 %v54
    %83 = vmatprep.subr.mxu0 0.0
    %84 = vmatpush1.msra.mxu0 %v55
    %85 = vmatprep.subr.mxu0 0.0
    %86 = vmatpush1.msra.mxu0 %v56
    %87 = vmatprep.subr.mxu0 0.0
    %88 = vmatpush1.msra.mxu0 %v57
    %89 = vmatprep.subr.mxu0 0.0
    %90 = vmatpush1.msra.mxu0 %v58
    %91 = vmatprep.subr.mxu0 0.0
    %92 = vmatpush1.msra.mxu0 0.0
    %93 = vmatprep.subr.mxu0 0.0
    %94 = vmatpush1.msra.mxu0 0.0
    %95 = vmatprep.subr.mxu0 0.0
    %96 = vmatpush1.msra.mxu0 0.0
    %97 = vmatprep.subr.mxu0 0.0
    %98 = vmatpush1.msra.mxu0 0.0
    %99 = vmatprep.subr.mxu0 0.0
    %100 = vmatpush1.msra.mxu0 0.0
    %101 = vmatprep.subr.mxu0 0.0
    %102 = vmatpush1.msra.mxu0 0.0
    %103 = vmatprep.subr.mxu0 0.0
    %104 = vmatpush1.msra.mxu0 0.0
    %105 = vmatprep.subr.mxu0 0.0
    %106 = vmatpush1.msra.mxu0 0.0
    %107 = vmatprep.subr.mxu0 0.0
    %108 = vmatpush1.msra.mxu0 0.0
    %109 = vmatprep.subr.mxu0 0.0
    %110 = vmatpush1.msra.mxu0 0.0
    %111 = vmatprep.subr.mxu0 0.0
    %112 = vmatpush1.msra.mxu0 0.0
    %113 = vmatprep.subr.mxu0 0.0
    %114 = vmatpush1.msra.mxu0 0.0
    %115 = vmatprep.subr.mxu0 0.0
    %116 = vmatpush1.msra.mxu0 0.0
    %117 = vmatprep.subr.mxu0 0.0
    %118 = vmatpush1.msra.mxu0 0.0
    %119 = vmatprep.subr.mxu0 0.0
    %120 = vmatpush1.msra.mxu0 0.0
    %121 = vmatprep.subr.mxu0 0.0
    %122 = vmatpush1.msra.mxu0 0.0
    %123 = vmatprep.mubr.f32.mxu0 0.0
    %124 = vmatmul.mubr.f32.gmra.mrb[0].mxu0 %v27
    %v125 = vpop.f32.mrb[0].mxu0
    %v126 = vadd.f32 0.0, %v125
    %v127 = vpop.f32.mrb[0].mxu0
    %128 = vmatprep.mubr.f32.mxu0 0.0
    %129 = vmatmul.mubr.f32.gmra.mrb[0].mxu0 %v28
    %v130 = vpop.f32.mrb[0].mxu0
    %v131 = vadd.f32 0.0, %v130
    %v132 = vpop.f32.mrb[0].mxu0
    %133 = vmatprep.mubr.f32.mxu0 0.0
    %134 = vmatmul.mubr.f32.gmra.mrb[0].mxu0 %v29
    %v135 = vpop.f32.mrb[0].mxu0
    %v136 = vadd.f32 0.0, %v135
    %v137 = vpop.f32.mrb[0].mxu0
    %138 = vmatprep.mubr.f32.mxu0 0.0
    %139 = vmatmul.mubr.f32.gmra.mrb[0].mxu0 %v30
    %v140 = vpop.f32.mrb[0].mxu0
    %v141 = vadd.f32 0.0, %v140
    %v142 = vpop.f32.mrb[0].mxu0
    %143 = vmatprep.mubr.f32.mxu0 0.0
    %144 = vmatmul.mubr.f32.gmra.mrb[0].mxu0 %v31
    %v145 = vpop.f32.mrb[0].mxu0
    %v146 = vadd.f32 0.0, %v145
    %v147 = vpop.f32.mrb[0].mxu0
    %148 = vmatprep.mubr.f32.mxu0 0.0
    %149 = vmatmul.mubr.f32.gmra.mrb[0].mxu0 %v32
    %v150 = vpop.f32.mrb[0].mxu0
    %v151 = vadd.f32 0.0, %v150
    %v152 = vpop.f32.mrb[0].mxu0
    %153 = vmatprep.mubr.f32.mxu0 0.0
    %154 = vmatmul.mubr.f32.gmra.mrb[0].mxu0 %v33
    %v155 = vpop.f32.mrb[0].mxu0
    %v156 = vadd.f32 0.0, %v155
    %v157 = vpop.f32.mrb[0].mxu0
    %158 = vmatprep.mubr.f32.mxu0 0.0
    %159 = vmatmul.mubr.f32.gmra.mrb[0].mxu0 %v34
    %v160 = vpop.f32.mrb[0].mxu0
    %v161 = vadd.f32 0.0, %v160
    %v162 = vpop.f32.mrb[0].mxu0
    %163 = vmatprep.mubr.f32.mxu0 0.0
    %164 = vmatmul.mubr.f32.gmra.mrb[0].mxu0 %v35
    %v165 = vpop.f32.mrb[0].mxu0
    %v166 = vadd.f32 0.0, %v165
    %v167 = vpop.f32.mrb[0].mxu0
    %168 = vmatprep.mubr.f32.mxu0 0.0
    %169 = vmatmul.mubr.f32.gmra.mrb[0].mxu0 %v36
    %v170 = vpop.f32.mrb[0].mxu0
    %v171 = vadd.f32 0.0, %v170
    %v172 = vpop.f32.mrb[0].mxu0
    %173 = vmatprep.mubr.f32.mxu0 0.0
    %174 = vmatmul.mubr.f32.gmra.mrb[0].mxu0 %v37
    %v175 = vpop.f32.mrb[0].mxu0
    %v176 = vadd.f32 0.0, %v175
    %v177 = vpop.f32.mrb[0].mxu0
    %178 = vmatprep.mubr.f32.mxu0 0.0
    %179 = vmatmul.mubr.f32.gmra.mrb[0].mxu0 %v38
    %v180 = vpop.f32.mrb[0].mxu0
    %v181 = vadd.f32 0.0, %v180
    %v182 = vpop.f32.mrb[0].mxu0
    %183 = vmatprep.mubr.f32.mxu0 0.0
    %184 = vmatmul.mubr.f32.gmra.mrb[0].mxu0 %v39
    %v185 = vpop.f32.mrb[0].mxu0
    %v186 = vadd.f32 0.0, %v185
    %v187 = vpop.f32.mrb[0].mxu0
    %188 = vmatprep.mubr.f32.mxu0 0.0
    %189 = vmatmul.mubr.f32.gmra.mrb[0].mxu0 %v40
    %v190 = vpop.f32.mrb[0].mxu0
    %v191 = vadd.f32 0.0, %v190
    %v192 = vpop.f32.mrb[0].mxu0
    %193 = vmatprep.mubr.f32.mxu0 0.0
    %194 = vmatmul.mubr.f32.gmra.mrb[0].mxu0 %v41
    %v195 = vpop.f32.mrb[0].mxu0
    %v196 = vadd.f32 0.0, %v195
    %v197 = vpop.f32.mrb[0].mxu0
    %198 = vmatprep.mubr.f32.mxu0 0.0
    %199 = vmatmul.mubr.f32.gmra.mrb[0].mxu0 %v42
    %v200 = vpop.f32.mrb[0].mxu0
    %v201 = vadd.f32 0.0, %v200
    %v202 = vpop.f32.mrb[0].mxu0
    %203 = vdwg.mxu0
    %v204 = vld [vmem:[%s1] sm:$0xff]
    %v205 = vld [vmem:[%s1 + $0x8] sm:$0xff]
    %v206 = vld [vmem:[%s1 + $0x10] sm:$0xff]
    %v207 = vld [vmem:[%s1 + $0x18] sm:$0xff]
    %v208 = vld [vmem:[%s1 + $0x20] sm:$0xff]
    %v209 = vld [vmem:[%s1 + $0x28] sm:$0xff]
    %v210 = vld [vmem:[%s1 + $0x30] sm:$0xff]
    %v211 = vld [vmem:[%s1 + $0x38] sm:$0xff]
    %v212 = vld [vmem:[%s1 + $0x40] sm:$0xff]
    %v213 = vld [vmem:[%s1 + $0x48] sm:$0xff]
    %v214 = vld [vmem:[%s1 + $0x50] sm:$0xff]
    %v215 = vld [vmem:[%s1 + $0x58] sm:$0xff]
    %v216 = vld [vmem:[%s1 + $0x60] sm:$0xff]
    %v217 = vld [vmem:[%s1 + $0x68] sm:$0xff]
    %v218 = vld [vmem:[%s1 + $0x70] sm:$0xff]
    %v219 = vld [vmem:[%s1 + $0x78] sm:$0xff]
    %220 = vmatprep.subr.mxu0 0.0
    %221 = vmatpush1.msra.mxu0 %v204
    %222 = vmatprep.subr.mxu0 0.0
    %223 = vmatpush1.msra.mxu0 %v205
    %224 = vmatprep.subr.mxu0 0.0
    %225 = vmatpush1.msra.mxu0 %v206
    %226 = vmatprep.subr.mxu0 0.0
    %227 = vmatpush1.msra.mxu0 %v207
    %228 = vmatprep.subr.mxu0 0.0
    %229 = vmatpush1.msra.mxu0 %v208
    %230 = vmatprep.subr.mxu0 0.0
    %231 = vmatpush1.msra.mxu0 %v209
    %232 = vmatprep.subr.mxu0 0.0
    %233 = vmatpush1.msra.mxu0 %v210
    %234 = vmatprep.subr.mxu0 0.0
    %235 = vmatpush1.msra.mxu0 %v211
    %236 = vmatprep.subr.mxu0 0.0
    %237 = vmatpush1.msra.mxu0 %v212
    %238 = vmatprep.subr.mxu0 0.0
    %239 = vmatpush1.msra.mxu0 %v213
    %240 = vmatprep.subr.mxu0 0.0
    %241 = vmatpush1.msra.mxu0 %v214
    %242 = vmatprep.subr.mxu0 0.0
    %243 = vmatpush1.msra.mxu0 %v215
    %244 = vmatprep.subr.mxu0 0.0
    %245 = vmatpush1.msra.mxu0 %v216
    %246 = vmatprep.subr.mxu0 0.0
    %247 = vmatpush1.msra.mxu0 %v217
    %248 = vmatprep.subr.mxu0 0.0
    %249 = vmatpush1.msra.mxu0 %v218
    %250 = vmatprep.subr.mxu0 0.0
    %251 = vmatpush1.msra.mxu0 %v219
    %252 = vmatprep.subr.mxu0 0.0
    %253 = vmatpush1.msra.mxu0 0.0
    %254 = vmatprep.subr.mxu0 0.0
    %255 = vmatpush1.msra.mxu0 0.0
    %256 = vmatprep.subr.mxu0 0.0
    %257 = vmatpush1.msra.mxu0 0.0
    %258 = vmatprep.subr.mxu0 0.0
    %259 = vmatpush1.msra.mxu0 0.0
    %260 = vmatprep.subr.mxu0 0.0
    %261 = vmatpush1.msra.mxu0 0.0
    %262 = vmatprep.subr.mxu0 0.0
    %263 = vmatpush1.msra.mxu0 0.0
    %264 = vmatprep.subr.mxu0 0.0
    %265 = vmatpush1.msra.mxu0 0.0
    %266 = vmatprep.subr.mxu0 0.0
    %267 = vmatpush1.msra.mxu0 0.0
    %268 = vmatprep.subr.mxu0 0.0
    %269 = vmatpush1.msra.mxu0 0.0
    %270 = vmatprep.subr.mxu0 0.0
    %271 = vmatpush1.msra.mxu0 0.0
    %272 = vmatprep.subr.mxu0 0.0
    %273 = vmatpush1.msra.mxu0 0.0
    %274 = vmatprep.subr.mxu0 0.0
    %275 = vmatpush1.msra.mxu0 0.0
    %276 = vmatprep.subr.mxu0 0.0
    %277 = vmatpush1.msra.mxu0 0.0
    %278 = vmatprep.subr.mxu0 0.0
    %279 = vmatpush1.msra.mxu0 0.0
    %280 = vmatprep.subr.mxu0 0.0
    %281 = vmatpush1.msra.mxu0 0.0
    %282 = vmatprep.subr.mxu0 0.0
    %283 = vmatpush1.msra.mxu0 0.0
    %284 = vmatprep.mubr.f32.mxu0 0.0
    %285 = vmatmul.mubr.f32.gmra.mrb[0].mxu0 %v27
    %v286 = vpop.f32.mrb[0].mxu0
    %v287 = vadd.f32 0.0, %v286
    %v288 = vpop.f32.mrb[0].mxu0
    %289 = vmatprep.mubr.f32.mxu0 0.0
    %290 = vmatmul.mubr.f32.gmra.mrb[0].mxu0 %v28
    %v291 = vpop.f32.mrb[0].mxu0
    %v292 = vadd.f32 0.0, %v291
    %v293 = vpop.f32.mrb[0].mxu0
    %294 = vmatprep.mubr.f32.mxu0 0.0
    %295 = vmatmul.mubr.f32.gmra.mrb[0].mxu0 %v29
    %v296 = vpop.f32.mrb[0].mxu0
    %v297 = vadd.f32 0.0, %v296
    %v298 = vpop.f32.mrb[0].mxu0
    %299 = vmatprep.mubr.f32.mxu0 0.0
    %300 = vmatmul.mubr.f32.gmra.mrb[0].mxu0 %v30
    %v301 = vpop.f32.mrb[0].mxu0
    %v302 = vadd.f32 0.0, %v301
    %v303 = vpop.f32.mrb[0].mxu0
    %304 = vmatprep.mubr.f32.mxu0 0.0
    %305 = vmatmul.mubr.f32.gmra.mrb[0].mxu0 %v31
    %v306 = vpop.f32.mrb[0].mxu0
    %v307 = vadd.f32 0.0, %v306
    %v308 = vpop.f32.mrb[0].mxu0
    %309 = vmatprep.mubr.f32.mxu0 0.0
    %310 = vmatmul.mubr.f32.gmra.mrb[0].mxu0 %v32
    %v311 = vpop.f32.mrb[0].mxu0
    %v312 = vadd.f32 0.0, %v311
    %v313 = vpop.f32.mrb[0].mxu0
    %314 = vmatprep.mubr.f32.mxu0 0.0
    %315 = vmatmul.mubr.f32.gmra.mrb[0].mxu0 %v33
    %v316 = vpop.f32.mrb[0].mxu0
    %v317 = vadd.f32 0.0, %v316
    %v318 = vpop.f32.mrb[0].mxu0
    %319 = vmatprep.mubr.f32.mxu0 0.0
    %320 = vmatmul.mubr.f32.gmra.mrb[0].mxu0 %v34
    %v321 = vpop.f32.mrb[0].mxu0
    %v322 = vadd.f32 0.0, %v321
    %v323 = vpop.f32.mrb[0].mxu0
    %324 = vmatprep.mubr.f32.mxu0 0.0
    %325 = vmatmul.mubr.f32.gmra.mrb[0].mxu0 %v35
    %v326 = vpop.f32.mrb[0].mxu0
    %v327 = vadd.f32 0.0, %v326
    %v328 = vpop.f32.mrb[0].mxu0
    %329 = vmatprep.mubr.f32.mxu0 0.0
    %330 = vmatmul.mubr.f32.gmra.mrb[0].mxu0 %v36
    %v331 = vpop.f32.mrb[0].mxu0
    %v332 = vadd.f32 0.0, %v331
    %v333 = vpop.f32.mrb[0].mxu0
    %334 = vmatprep.mubr.f32.mxu0 0.0
    %335 = vmatmul.mubr.f32.gmra.mrb[0].mxu0 %v37
    %v336 = vpop.f32.mrb[0].mxu0
    %v337 = vadd.f32 0.0, %v336
    %v338 = vpop.f32.mrb[0].mxu0
    %339 = vmatprep.mubr.f32.mxu0 0.0
    %340 = vmatmul.mubr.f32.gmra.mrb[0].mxu0 %v38
    %v341 = vpop.f32.mrb[0].mxu0
    %v342 = vadd.f32 0.0, %v341
    %v343 = vpop.f32.mrb[0].mxu0
    %344 = vmatprep.mubr.f32.mxu0 0.0
    %345 = vmatmul.mubr.f32.gmra.mrb[0].mxu0 %v39
    %v346 = vpop.f32.mrb[0].mxu0
    %v347 = vadd.f32 0.0, %v346
    %v348 = vpop.f32.mrb[0].mxu0
    %349 = vmatprep.mubr.f32.mxu0 0.0
    %350 = vmatmul.mubr.f32.gmra.mrb[0].mxu0 %v40
    %v351 = vpop.f32.mrb[0].mxu0
    %v352 = vadd.f32 0.0, %v351
    %v353 = vpop.f32.mrb[0].mxu0
    %354 = vmatprep.mubr.f32.mxu0 0.0
    %355 = vmatmul.mubr.f32.gmra.mrb[0].mxu0 %v41
    %v356 = vpop.f32.mrb[0].mxu0
    %v357 = vadd.f32 0.0, %v356
    %v358 = vpop.f32.mrb[0].mxu0
    %359 = vmatprep.mubr.f32.mxu0 0.0
    %360 = vmatmul.mubr.f32.gmra.mrb[0].mxu0 %v42
    %v361 = vpop.f32.mrb[0].mxu0
    %v362 = vadd.f32 0.0, %v361
    %v363 = vpop.f32.mrb[0].mxu0
    %364 = vdwg.mxu0
    %v365 = vld [vmem:[%s3] sm:$0xff]
    %v366 = vld [vmem:[%s3 + $0x8] sm:$0xff]
    %v367 = vld [vmem:[%s3 + $0x10] sm:$0xff]
    %v368 = vld [vmem:[%s3 + $0x18] sm:$0xff]
    %v369 = vld [vmem:[%s3 + $0x20] sm:$0xff]
    %v370 = vld [vmem:[%s3 + $0x28] sm:$0xff]
    %v371 = vld [vmem:[%s3 + $0x30] sm:$0xff]
    %v372 = vld [vmem:[%s3 + $0x38] sm:$0xff]
    %v373 = vld [vmem:[%s3 + $0x40] sm:$0xff]
    %v374 = vld [vmem:[%s3 + $0x48] sm:$0xff]
    %v375 = vld [vmem:[%s3 + $0x50] sm:$0xff]
    %v376 = vld [vmem:[%s3 + $0x58] sm:$0xff]
    %v377 = vld [vmem:[%s3 + $0x60] sm:$0xff]
    %v378 = vld [vmem:[%s3 + $0x68] sm:$0xff]
    %v379 = vld [vmem:[%s3 + $0x70] sm:$0xff]
    %v380 = vld [vmem:[%s3 + $0x78] sm:$0xff]
    %v381 = vld [vmem:[%s4] sm:$0xff]
    %v382 = vld [vmem:[%s4 + $0x8] sm:$0xff]
    %v383 = vld [vmem:[%s4 + $0x10] sm:$0xff]
    %v384 = vld [vmem:[%s4 + $0x18] sm:$0xff]
    %v385 = vld [vmem:[%s4 + $0x20] sm:$0xff]
    %v386 = vld [vmem:[%s4 + $0x28] sm:$0xff]
    %v387 = vld [vmem:[%s4 + $0x30] sm:$0xff]
    %v388 = vld [vmem:[%s4 + $0x38] sm:$0xff]
    %v389 = vld [vmem:[%s4 + $0x40] sm:$0xff]
    %v390 = vld [vmem:[%s4 + $0x48] sm:$0xff]
    %v391 = vld [vmem:[%s4 + $0x50] sm:$0xff]
    %v392 = vld [vmem:[%s4 + $0x58] sm:$0xff]
    %v393 = vld [vmem:[%s4 + $0x60] sm:$0xff]
    %v394 = vld [vmem:[%s4 + $0x68] sm:$0xff]
    %v395 = vld [vmem:[%s4 + $0x70] sm:$0xff]
    %v396 = vld [vmem:[%s4 + $0x78] sm:$0xff]
    %398 = vset.pattern.permute.xlu0 0
    %399 = vperm.xlu0 %398, %v381
    %v400 = vpop.permute.xlu0 %399
    %403 = vset.pattern.permute.xlu0 0
    %404 = vperm.xlu0 %403, %v382
    %v405 = vpop.permute.xlu0 %404
    %408 = vset.pattern.permute.xlu0 0
    %409 = vperm.xlu0 %408, %v383
    %v410 = vpop.permute.xlu0 %409
    %413 = vset.pattern.permute.xlu0 0
    %414 = vperm.xlu0 %413, %v384
    %v415 = vpop.permute.xlu0 %414
    %418 = vset.pattern.permute.xlu0 0
    %419 = vperm.xlu0 %418, %v385
    %v420 = vpop.permute.xlu0 %419
    %423 = vset.pattern.permute.xlu0 0
    %424 = vperm.xlu0 %423, %v386
    %v425 = vpop.permute.xlu0 %424
    %428 = vset.pattern.permute.xlu0 0
    %429 = vperm.xlu0 %428, %v387
    %v430 = vpop.permute.xlu0 %429
    %433 = vset.pattern.permute.xlu0 0
    %434 = vperm.xlu0 %433, %v388
    %v435 = vpop.permute.xlu0 %434
    %438 = vset.pattern.permute.xlu0 0
    %439 = vperm.xlu0 %438, %v389
    %v440 = vpop.permute.xlu0 %439
    %443 = vset.pattern.permute.xlu0 0
    %444 = vperm.xlu0 %443, %v390
    %v445 = vpop.permute.xlu0 %444
    %448 = vset.pattern.permute.xlu0 0
    %449 = vperm.xlu0 %448, %v391
    %v450 = vpop.permute.xlu0 %449
    %453 = vset.pattern.permute.xlu0 0
    %454 = vperm.xlu0 %453, %v392
    %v455 = vpop.permute.xlu0 %454
    %458 = vset.pattern.permute.xlu0 0
    %459 = vperm.xlu0 %458, %v393
    %v460 = vpop.permute.xlu0 %459
    %463 = vset.pattern.permute.xlu0 0
    %464 = vperm.xlu0 %463, %v394
    %v465 = vpop.permute.xlu0 %464
    %468 = vset.pattern.permute.xlu0 0
    %469 = vperm.xlu0 %468, %v395
    %v470 = vpop.permute.xlu0 %469
    %473 = vset.pattern.permute.xlu0 0
    %474 = vperm.xlu0 %473, %v396
    %v475 = vpop.permute.xlu0 %474
    %477 = vmatprep.subr.mxu0 0.0
    %478 = vmatpush1.msra.mxu0 %v126
    %479 = vmatprep.subr.mxu0 0.0
    %480 = vmatpush1.msra.mxu0 %v131
    %481 = vmatprep.subr.mxu0 0.0
    %482 = vmatpush1.msra.mxu0 %v136
    %483 = vmatprep.subr.mxu0 0.0
    %484 = vmatpush1.msra.mxu0 %v141
    %485 = vmatprep.subr.mxu0 0.0
    %486 = vmatpush1.msra.mxu0 %v146
    %487 = vmatprep.subr.mxu0 0.0
    %488 = vmatpush1.msra.mxu0 %v151
    %489 = vmatprep.subr.mxu0 0.0
    %490 = vmatpush1.msra.mxu0 %v156
    %491 = vmatprep.subr.mxu0 0.0
    %492 = vmatpush1.msra.mxu0 %v161
    %493 = vmatprep.subr.mxu0 0.0
    %494 = vmatpush1.msra.mxu0 %v166
    %495 = vmatprep.subr.mxu0 0.0
    %496 = vmatpush1.msra.mxu0 %v171
    %497 = vmatprep.subr.mxu0 0.0
    %498 = vmatpush1.msra.mxu0 %v176
    %499 = vmatprep.subr.mxu0 0.0
    %500 = vmatpush1.msra.mxu0 %v181
    %501 = vmatprep.subr.mxu0 0.0
    %502 = vmatpush1.msra.mxu0 %v186
    %503 = vmatprep.subr.mxu0 0.0
    %504 = vmatpush1.msra.mxu0 %v191
    %505 = vmatprep.subr.mxu0 0.0
    %506 = vmatpush1.msra.mxu0 %v196
    %507 = vmatprep.subr.mxu0 0.0
    %508 = vmatpush1.msra.mxu0 %v201
    %509 = vmatprep.subr.mxu0 0.0
    %510 = vmatpush1.msra.mxu0 0.0
    %511 = vmatprep.subr.mxu0 0.0
    %512 = vmatpush1.msra.mxu0 0.0
    %513 = vmatprep.subr.mxu0 0.0
    %514 = vmatpush1.msra.mxu0 0.0
    %515 = vmatprep.subr.mxu0 0.0
    %516 = vmatpush1.msra.mxu0 0.0
    %517 = vmatprep.subr.mxu0 0.0
    %518 = vmatpush1.msra.mxu0 0.0
    %519 = vmatprep.subr.mxu0 0.0
    %520 = vmatpush1.msra.mxu0 0.0
    %521 = vmatprep.subr.mxu0 0.0
    %522 = vmatpush1.msra.mxu0 0.0
    %523 = vmatprep.subr.mxu0 0.0
    %524 = vmatpush1.msra.mxu0 0.0
    %525 = vmatprep.subr.mxu0 0.0
    %526 = vmatpush1.msra.mxu0 0.0
    %527 = vmatprep.subr.mxu0 0.0
    %528 = vmatpush1.msra.mxu0 0.0
    %529 = vmatprep.subr.mxu0 0.0
    %530 = vmatpush1.msra.mxu0 0.0
    %531 = vmatprep.subr.mxu0 0.0
    %532 = vmatpush1.msra.mxu0 0.0
    %533 = vmatprep.subr.mxu0 0.0
    %534 = vmatpush1.msra.mxu0 0.0
    %535 = vmatprep.subr.mxu0 0.0
    %536 = vmatpush1.msra.mxu0 0.0
    %537 = vmatprep.subr.mxu0 0.0
    %538 = vmatpush1.msra.mxu0 0.0
    %539 = vmatprep.subr.mxu0 0.0
    %540 = vmatpush1.msra.mxu0 0.0
    %541 = vmatprep.mubr.f32.mxu0 0.0
    %542 = vmatmul.mubr.f32.gmra.mrb[0].mxu0 %v365
    %v543 = vpop.f32.mrb[0].mxu0
    %v544 = vadd.f32 %v400, %v543
    %v545 = vpop.f32.mrb[0].mxu0
    %546 = vmatprep.mubr.f32.mxu0 0.0
    %547 = vmatmul.mubr.f32.gmra.mrb[0].mxu0 %v366
    %v548 = vpop.f32.mrb[0].mxu0
    %v549 = vadd.f32 %v405, %v548
    %v550 = vpop.f32.mrb[0].mxu0
    %551 = vmatprep.mubr.f32.mxu0 0.0
    %552 = vmatmul.mubr.f32.gmra.mrb[0].mxu0 %v367
    %v553 = vpop.f32.mrb[0].mxu0
    %v554 = vadd.f32 %v410, %v553
    %v555 = vpop.f32.mrb[0].mxu0
    %556 = vmatprep.mubr.f32.mxu0 0.0
    %557 = vmatmul.mubr.f32.gmra.mrb[0].mxu0 %v368
    %v558 = vpop.f32.mrb[0].mxu0
    %v559 = vadd.f32 %v415, %v558
    %v560 = vpop.f32.mrb[0].mxu0
    %561 = vmatprep.mubr.f32.mxu0 0.0
    %562 = vmatmul.mubr.f32.gmra.mrb[0].mxu0 %v369
    %v563 = vpop.f32.mrb[0].mxu0
    %v564 = vadd.f32 %v420, %v563
    %v565 = vpop.f32.mrb[0].mxu0
    %566 = vmatprep.mubr.f32.mxu0 0.0
    %567 = vmatmul.mubr.f32.gmra.mrb[0].mxu0 %v370
    %v568 = vpop.f32.mrb[0].mxu0
    %v569 = vadd.f32 %v425, %v568
    %v570 = vpop.f32.mrb[0].mxu0
    %571 = vmatprep.mubr.f32.mxu0 0.0
    %572 = vmatmul.mubr.f32.gmra.mrb[0].mxu0 %v371
    %v573 = vpop.f32.mrb[0].mxu0
    %v574 = vadd.f32 %v430, %v573
    %v575 = vpop.f32.mrb[0].mxu0
    %576 = vmatprep.mubr.f32.mxu0 0.0
    %577 = vmatmul.mubr.f32.gmra.mrb[0].mxu0 %v372
    %v578 = vpop.f32.mrb[0].mxu0
    %v579 = vadd.f32 %v435, %v578
    %v580 = vpop.f32.mrb[0].mxu0
    %581 = vmatprep.mubr.f32.mxu0 0.0
    %582 = vmatmul.mubr.f32.gmra.mrb[0].mxu0 %v373
    %v583 = vpop.f32.mrb[0].mxu0
    %v584 = vadd.f32 %v440, %v583
    %v585 = vpop.f32.mrb[0].mxu0
    %586 = vmatprep.mubr.f32.mxu0 0.0
    %587 = vmatmul.mubr.f32.gmra.mrb[0].mxu0 %v374
    %v588 = vpop.f32.mrb[0].mxu0
    %v589 = vadd.f32 %v445, %v588
    %v590 = vpop.f32.mrb[0].mxu0
    %591 = vmatprep.mubr.f32.mxu0 0.0
    %592 = vmatmul.mubr.f32.gmra.mrb[0].mxu0 %v375
    %v593 = vpop.f32.mrb[0].mxu0
    %v594 = vadd.f32 %v450, %v593
    %v595 = vpop.f32.mrb[0].mxu0
    %596 = vmatprep.mubr.f32.mxu0 0.0
    %597 = vmatmul.mubr.f32.gmra.mrb[0].mxu0 %v376
    %v598 = vpop.f32.mrb[0].mxu0
    %v599 = vadd.f32 %v455, %v598
    %v600 = vpop.f32.mrb[0].mxu0
    %601 = vmatprep.mubr.f32.mxu0 0.0
    %602 = vmatmul.mubr.f32.gmra.mrb[0].mxu0 %v377
    %v603 = vpop.f32.mrb[0].mxu0
    %v604 = vadd.f32 %v460, %v603
    %v605 = vpop.f32.mrb[0].mxu0
    %606 = vmatprep.mubr.f32.mxu0 0.0
    %607 = vmatmul.mubr.f32.gmra.mrb[0].mxu0 %v378
    %v608 = vpop.f32.mrb[0].mxu0
    %v609 = vadd.f32 %v465, %v608
    %v610 = vpop.f32.mrb[0].mxu0
    %611 = vmatprep.mubr.f32.mxu0 0.0
    %612 = vmatmul.mubr.f32.gmra.mrb[0].mxu0 %v379
    %v613 = vpop.f32.mrb[0].mxu0
    %v614 = vadd.f32 %v470, %v613
    %v615 = vpop.f32.mrb[0].mxu0
    %616 = vmatprep.mubr.f32.mxu0 0.0
    %617 = vmatmul.mubr.f32.gmra.mrb[0].mxu0 %v380
    %v618 = vpop.f32.mrb[0].mxu0
    %v619 = vadd.f32 %v475, %v618
    %v620 = vpop.f32.mrb[0].mxu0
    %621 = vdwg.mxu0
    %v622 = vtanh.pop %v544
    %v623 = vtanh.pop %v549
    %v624 = vtanh.pop %v554
    %v625 = vtanh.pop %v559
    %v626 = vtanh.pop %v564
    %v627 = vtanh.pop %v569
    %v628 = vtanh.pop %v574
    %v629 = vtanh.pop %v579
    %v630 = vtanh.pop %v584
    %v631 = vtanh.pop %v589
    %v632 = vtanh.pop %v594
    %v633 = vtanh.pop %v599
    %v634 = vtanh.pop %v604
    %v635 = vtanh.pop %v609
    %v636 = vtanh.pop %v614
    %v637 = vtanh.pop %v619
    %v638 = vld [vmem:[%s5] sm:$0xff]
    %v639 = vld [vmem:[%s5 + $0x8] sm:$0xff]
    %v640 = vld [vmem:[%s5 + $0x10] sm:$0xff]
    %v641 = vld [vmem:[%s5 + $0x18] sm:$0xff]
    %v642 = vld [vmem:[%s5 + $0x20] sm:$0xff]
    %v643 = vld [vmem:[%s5 + $0x28] sm:$0xff]
    %v644 = vld [vmem:[%s5 + $0x30] sm:$0xff]
    %v645 = vld [vmem:[%s5 + $0x38] sm:$0xff]
    %v646 = vld [vmem:[%s5 + $0x40] sm:$0xff]
    %v647 = vld [vmem:[%s5 + $0x48] sm:$0xff]
    %v648 = vld [vmem:[%s5 + $0x50] sm:$0xff]
    %v649 = vld [vmem:[%s5 + $0x58] sm:$0xff]
    %v650 = vld [vmem:[%s5 + $0x60] sm:$0xff]
    %v651 = vld [vmem:[%s5 + $0x68] sm:$0xff]
    %v652 = vld [vmem:[%s5 + $0x70] sm:$0xff]
    %v653 = vld [vmem:[%s5 + $0x78] sm:$0xff]
    %v654 = vld [vmem:[%s6] sm:$0xff]
    %v655 = vld [vmem:[%s6 + $0x8] sm:$0xff]
    %v656 = vld [vmem:[%s6 + $0x10] sm:$0xff]
    %v657 = vld [vmem:[%s6 + $0x18] sm:$0xff]
    %v658 = vld [vmem:[%s6 + $0x20] sm:$0xff]
    %v659 = vld [vmem:[%s6 + $0x28] sm:$0xff]
    %v660 = vld [vmem:[%s6 + $0x30] sm:$0xff]
    %v661 = vld [vmem:[%s6 + $0x38] sm:$0xff]
    %v662 = vld [vmem:[%s6 + $0x40] sm:$0xff]
    %v663 = vld [vmem:[%s6 + $0x48] sm:$0xff]
    %v664 = vld [vmem:[%s6 + $0x50] sm:$0xff]
    %v665 = vld [vmem:[%s6 + $0x58] sm:$0xff]
    %v666 = vld [vmem:[%s6 + $0x60] sm:$0xff]
    %v667 = vld [vmem:[%s6 + $0x68] sm:$0xff]
    %v668 = vld [vmem:[%s6 + $0x70] sm:$0xff]
    %v669 = vld [vmem:[%s6 + $0x78] sm:$0xff]
    %671 = vset.pattern.permute.xlu0 0
    %672 = vperm.xlu0 %671, %v654
    %v673 = vpop.permute.xlu0 %672
    %676 = vset.pattern.permute.xlu0 0
    %677 = vperm.xlu0 %676, %v655
    %v678 = vpop.permute.xlu0 %677
    %681 = vset.pattern.permute.xlu0 0
    %682 = vperm.xlu0 %681, %v656
    %v683 = vpop.permute.xlu0 %682
    %686 = vset.pattern.permute.xlu0 0
    %687 = vperm.xlu0 %686, %v657
    %v688 = vpop.permute.xlu0 %687
    %691 = vset.pattern.permute.xlu0 0
    %692 = vperm.xlu0 %691, %v658
    %v693 = vpop.permute.xlu0 %692
    %696 = vset.pattern.permute.xlu0 0
    %697 = vperm.xlu0 %696, %v659
    %v698 = vpop.permute.xlu0 %697
    %701 = vset.pattern.permute.xlu0 0
    %702 = vperm.xlu0 %701, %v660
    %v703 = vpop.permute.xlu0 %702
    %706 = vset.pattern.permute.xlu0 0
    %707 = vperm.xlu0 %706, %v661
    %v708 = vpop.permute.xlu0 %707
    %711 = vset.pattern.permute.xlu0 0
    %712 = vperm.xlu0 %711, %v662
    %v713 = vpop.permute.xlu0 %712
    %716 = vset.pattern.permute.xlu0 0
    %717 = vperm.xlu0 %716, %v663
    %v718 = vpop.permute.xlu0 %717
    %721 = vset.pattern.permute.xlu0 0
    %722 = vperm.xlu0 %721, %v664
    %v723 = vpop.permute.xlu0 %722
    %726 = vset.pattern.permute.xlu0 0
    %727 = vperm.xlu0 %726, %v665
    %v728 = vpop.permute.xlu0 %727
    %731 = vset.pattern.permute.xlu0 0
    %732 = vperm.xlu0 %731, %v666
    %v733 = vpop.permute.xlu0 %732
    %736 = vset.pattern.permute.xlu0 0
    %737 = vperm.xlu0 %736, %v667
    %v738 = vpop.permute.xlu0 %737
    %741 = vset.pattern.permute.xlu0 0
    %742 = vperm.xlu0 %741, %v668
    %v743 = vpop.permute.xlu0 %742
    %746 = vset.pattern.permute.xlu0 0
    %747 = vperm.xlu0 %746, %v669
    %v748 = vpop.permute.xlu0 %747
    %750 = vmatprep.subr.mxu0 0.0
    %751 = vmatpush1.msra.mxu0 %v287
    %752 = vmatprep.subr.mxu0 0.0
    %753 = vmatpush1.msra.mxu0 %v292
    %754 = vmatprep.subr.mxu0 0.0
    %755 = vmatpush1.msra.mxu0 %v297
    %756 = vmatprep.subr.mxu0 0.0
    %757 = vmatpush1.msra.mxu0 %v302
    %758 = vmatprep.subr.mxu0 0.0
    %759 = vmatpush1.msra.mxu0 %v307
    %760 = vmatprep.subr.mxu0 0.0
    %761 = vmatpush1.msra.mxu0 %v312
    %762 = vmatprep.subr.mxu0 0.0
    %763 = vmatpush1.msra.mxu0 %v317
    %764 = vmatprep.subr.mxu0 0.0
    %765 = vmatpush1.msra.mxu0 %v322
    %766 = vmatprep.subr.mxu0 0.0
    %767 = vmatpush1.msra.mxu0 %v327
    %768 = vmatprep.subr.mxu0 0.0
    %769 = vmatpush1.msra.mxu0 %v332
    %770 = vmatprep.subr.mxu0 0.0
    %771 = vmatpush1.msra.mxu0 %v337
    %772 = vmatprep.subr.mxu0 0.0
    %773 = vmatpush1.msra.mxu0 %v342
    %774 = vmatprep.subr.mxu0 0.0
    %775 = vmatpush1.msra.mxu0 %v347
    %776 = vmatprep.subr.mxu0 0.0
    %777 = vmatpush1.msra.mxu0 %v352
    %778 = vmatprep.subr.mxu0 0.0
    %779 = vmatpush1.msra.mxu0 %v357
    %780 = vmatprep.subr.mxu0 0.0
    %781 = vmatpush1.msra.mxu0 %v362
    %782 = vmatprep.subr.mxu0 0.0
    %783 = vmatpush1.msra.mxu0 0.0
    %784 = vmatprep.subr.mxu0 0.0
    %785 = vmatpush1.msra.mxu0 0.0
    %786 = vmatprep.subr.mxu0 0.0
    %787 = vmatpush1.msra.mxu0 0.0
    %788 = vmatprep.subr.mxu0 0.0
    %789 = vmatpush1.msra.mxu0 0.0
    %790 = vmatprep.subr.mxu0 0.0
    %791 = vmatpush1.msra.mxu0 0.0
    %792 = vmatprep.subr.mxu0 0.0
    %793 = vmatpush1.msra.mxu0 0.0
    %794 = vmatprep.subr.mxu0 0.0
    %795 = vmatpush1.msra.mxu0 0.0
    %796 = vmatprep.subr.mxu0 0.0
    %797 = vmatpush1.msra.mxu0 0.0
    %798 = vmatprep.subr.mxu0 0.0
    %799 = vmatpush1.msra.mxu0 0.0
    %800 = vmatprep.subr.mxu0 0.0
    %801 = vmatpush1.msra.mxu0 0.0
    %802 = vmatprep.subr.mxu0 0.0
    %803 = vmatpush1.msra.mxu0 0.0
    %804 = vmatprep.subr.mxu0 0.0
    %805 = vmatpush1.msra.mxu0 0.0
    %806 = vmatprep.subr.mxu0 0.0
    %807 = vmatpush1.msra.mxu0 0.0
    %808 = vmatprep.subr.mxu0 0.0
    %809 = vmatpush1.msra.mxu0 0.0
    %810 = vmatprep.subr.mxu0 0.0
    %811 = vmatpush1.msra.mxu0 0.0
    %812 = vmatprep.subr.mxu0 0.0
    %813 = vmatpush1.msra.mxu0 0.0
    %814 = vmatprep.mubr.f32.mxu0 0.0
    %815 = vmatmul.mubr.f32.gmra.mrb[0].mxu0 %v638
    %v816 = vpop.f32.mrb[0].mxu0
    %v817 = vadd.f32 %v673, %v816
    %v818 = vpop.f32.mrb[0].mxu0
    %819 = vmatprep.mubr.f32.mxu0 0.0
    %820 = vmatmul.mubr.f32.gmra.mrb[0].mxu0 %v639
    %v821 = vpop.f32.mrb[0].mxu0
    %v822 = vadd.f32 %v678, %v821
    %v823 = vpop.f32.mrb[0].mxu0
    %824 = vmatprep.mubr.f32.mxu0 0.0
    %825 = vmatmul.mubr.f32.gmra.mrb[0].mxu0 %v640
    %v826 = vpop.f32.mrb[0].mxu0
    %v827 = vadd.f32 %v683, %v826
    %v828 = vpop.f32.mrb[0].mxu0
    %829 = vmatprep.mubr.f32.mxu0 0.0
    %830 = vmatmul.mubr.f32.gmra.mrb[0].mxu0 %v641
    %v831 = vpop.f32.mrb[0].mxu0
    %v832 = vadd.f32 %v688, %v831
    %v833 = vpop.f32.mrb[0].mxu0
    %834 = vmatprep.mubr.f32.mxu0 0.0
    %835 = vmatmul.mubr.f32.gmra.mrb[0].mxu0 %v642
    %v836 = vpop.f32.mrb[0].mxu0
    %v837 = vadd.f32 %v693, %v836
    %v838 = vpop.f32.mrb[0].mxu0
    %839 = vmatprep.mubr.f32.mxu0 0.0
    %840 = vmatmul.mubr.f32.gmra.mrb[0].mxu0 %v643
    %v841 = vpop.f32.mrb[0].mxu0
    %v842 = vadd.f32 %v698, %v841
    %v843 = vpop.f32.mrb[0].mxu0
    %844 = vmatprep.mubr.f32.mxu0 0.0
    %845 = vmatmul.mubr.f32.gmra.mrb[0].mxu0 %v644
    %v846 = vpop.f32.mrb[0].mxu0
    %v847 = vadd.f32 %v703, %v846
    %v848 = vpop.f32.mrb[0].mxu0
    %849 = vmatprep.mubr.f32.mxu0 0.0
    %850 = vmatmul.mubr.f32.gmra.mrb[0].mxu0 %v645
    %v851 = vpop.f32.mrb[0].mxu0
    %v852 = vadd.f32 %v708, %v851
    %v853 = vpop.f32.mrb[0].mxu0
    %854 = vmatprep.mubr.f32.mxu0 0.0
    %855 = vmatmul.mubr.f32.gmra.mrb[0].mxu0 %v646
    %v856 = vpop.f32.mrb[0].mxu0
    %v857 = vadd.f32 %v713, %v856
    %v858 = vpop.f32.mrb[0].mxu0
    %859 = vmatprep.mubr.f32.mxu0 0.0
    %860 = vmatmul.mubr.f32.gmra.mrb[0].mxu0 %v647
    %v861 = vpop.f32.mrb[0].mxu0
    %v862 = vadd.f32 %v718, %v861
    %v863 = vpop.f32.mrb[0].mxu0
    %864 = vmatprep.mubr.f32.mxu0 0.0
    %865 = vmatmul.mubr.f32.gmra.mrb[0].mxu0 %v648
    %v866 = vpop.f32.mrb[0].mxu0
    %v867 = vadd.f32 %v723, %v866
    %v868 = vpop.f32.mrb[0].mxu0
    %869 = vmatprep.mubr.f32.mxu0 0.0
    %870 = vmatmul.mubr.f32.gmra.mrb[0].mxu0 %v649
    %v871 = vpop.f32.mrb[0].mxu0
    %v872 = vadd.f32 %v728, %v871
    %v873 = vpop.f32.mrb[0].mxu0
    %874 = vmatprep.mubr.f32.mxu0 0.0
    %875 = vmatmul.mubr.f32.gmra.mrb[0].mxu0 %v650
    %v876 = vpop.f32.mrb[0].mxu0
    %v877 = vadd.f32 %v733, %v876
    %v878 = vpop.f32.mrb[0].mxu0
    %879 = vmatprep.mubr.f32.mxu0 0.0
    %880 = vmatmul.mubr.f32.gmra.mrb[0].mxu0 %v651
    %v881 = vpop.f32.mrb[0].mxu0
    %v882 = vadd.f32 %v738, %v881
    %v883 = vpop.f32.mrb[0].mxu0
    %884 = vmatprep.mubr.f32.mxu0 0.0
    %885 = vmatmul.mubr.f32.gmra.mrb[0].mxu0 %v652
    %v886 = vpop.f32.mrb[0].mxu0
    %v887 = vadd.f32 %v743, %v886
    %v888 = vpop.f32.mrb[0].mxu0
    %889 = vmatprep.mubr.f32.mxu0 0.0
    %890 = vmatmul.mubr.f32.gmra.mrb[0].mxu0 %v653
    %v891 = vpop.f32.mrb[0].mxu0
    %v892 = vadd.f32 %v748, %v891
    %v893 = vpop.f32.mrb[0].mxu0
    %894 = vdwg.mxu0
    %v895 = vtanh.pop %v817
    %v896 = vtanh.pop %v822
    %v897 = vtanh.pop %v827
    %v898 = vtanh.pop %v832
    %v899 = vtanh.pop %v837
    %v900 = vtanh.pop %v842
    %v901 = vtanh.pop %v847
    %v902 = vtanh.pop %v852
    %v903 = vtanh.pop %v857
    %v904 = vtanh.pop %v862
    %v905 = vtanh.pop %v867
    %v906 = vtanh.pop %v872
    %v907 = vtanh.pop %v877
    %v908 = vtanh.pop %v882
    %v909 = vtanh.pop %v887
    %v910 = vtanh.pop %v892
    %v911 = vmul.f32 %v622, %v895
    %v912 = vmul.f32 %v623, %v896
    %v913 = vmul.f32 %v624, %v897
    %v914 = vmul.f32 %v625, %v898
    %v915 = vmul.f32 %v626, %v899
    %v916 = vmul.f32 %v627, %v900
    %v917 = vmul.f32 %v628, %v901
    %v918 = vmul.f32 %v629, %v902
    %v919 = vmul.f32 %v630, %v903
    %v920 = vmul.f32 %v631, %v904
    %v921 = vmul.f32 %v632, %v905
    %v922 = vmul.f32 %v633, %v906
    %v923 = vmul.f32 %v634, %v907
    %v924 = vmul.f32 %v635, %v908
    %v925 = vmul.f32 %v636, %v909
    %v926 = vmul.f32 %v637, %v910
    %vm927 = vcmask 64512
    %v928 = vsel %vm927, %v911, 0.0
    %v929 = vsel %vm927, %v912, 0.0
    %v930 = vadd.f32 %v928, %v929
    %v931 = vsel %vm927, %v913, 0.0
    %v932 = vadd.f32 %v930, %v931
    %v933 = vsel %vm927, %v914, 0.0
    %v934 = vadd.f32 %v932, %v933
    %v935 = vsel %vm927, %v915, 0.0
    %v936 = vadd.f32 %v934, %v935
    %v937 = vsel %vm927, %v916, 0.0
    %v938 = vadd.f32 %v936, %v937
    %v939 = vsel %vm927, %v917, 0.0
    %v940 = vadd.f32 %v938, %v939
    %v941 = vsel %vm927, %v918, 0.0
    %v942 = vadd.f32 %v940, %v941
    %v943 = vsel %vm927, %v919, 0.0
    %v944 = vadd.f32 %v942, %v943
    %v945 = vsel %vm927, %v920, 0.0
    %v946 = vadd.f32 %v944, %v945
    %v947 = vsel %vm927, %v921, 0.0
    %v948 = vadd.f32 %v946, %v947
    %v949 = vsel %vm927, %v922, 0.0
    %v950 = vadd.f32 %v948, %v949
    %v951 = vsel %vm927, %v923, 0.0
    %v952 = vadd.f32 %v950, %v951
    %v953 = vsel %vm927, %v924, 0.0
    %v954 = vadd.f32 %v952, %v953
    %v955 = vsel %vm927, %v925, 0.0
    %v956 = vadd.f32 %v954, %v955
    %v957 = vsel %vm927, %v926, 0.0
    %v958 = vadd.f32 %v956, %v957
    %v959 = vrot.slane %v958, 4
    %v960 = vadd.f32 %v958, %v959
    %v961 = vrot.slane %v960, 2
    %v962 = vadd.f32 %v960, %v961
    %v963 = vrot.slane %v962, 1
    %v964 = vadd.f32 %v962, %v963
    %v965 = vmul.f32 %v622, %v622
    %v966 = vmul.f32 %v623, %v623
    %v967 = vmul.f32 %v624, %v624
    %v968 = vmul.f32 %v625, %v625
    %v969 = vmul.f32 %v626, %v626
    %v970 = vmul.f32 %v627, %v627
    %v971 = vmul.f32 %v628, %v628
    %v972 = vmul.f32 %v629, %v629
    %v973 = vmul.f32 %v630, %v630
    %v974 = vmul.f32 %v631, %v631
    %v975 = vmul.f32 %v632, %v632
    %v976 = vmul.f32 %v633, %v633
    %v977 = vmul.f32 %v634, %v634
    %v978 = vmul.f32 %v635, %v635
    %v979 = vmul.f32 %v636, %v636
    %v980 = vmul.f32 %v637, %v637
    %v981 = vsel %vm927, %v965, 0.0
    %v982 = vsel %vm927, %v966, 0.0
    %v983 = vadd.f32 %v981, %v982
    %v984 = vsel %vm927, %v967, 0.0
    %v985 = vadd.f32 %v983, %v984
    %v986 = vsel %vm927, %v968, 0.0
    %v987 = vadd.f32 %v985, %v986
    %v988 = vsel %vm927, %v969, 0.0
    %v989 = vadd.f32 %v987, %v988
    %v990 = vsel %vm927, %v970, 0.0
    %v991 = vadd.f32 %v989, %v990
    %v992 = vsel %vm927, %v971, 0.0
    %v993 = vadd.f32 %v991, %v992
    %v994 = vsel %vm927, %v972, 0.0
    %v995 = vadd.f32 %v993, %v994
    %v996 = vsel %vm927, %v973, 0.0
    %v997 = vadd.f32 %v995, %v996
    %v998 = vsel %vm927, %v974, 0.0
    %v999 = vadd.f32 %v997, %v998
    %v1000 = vsel %vm927, %v975, 0.0
    %v1001 = vadd.f32 %v999, %v1000
    %v1002 = vsel %vm927, %v976, 0.0
    %v1003 = vadd.f32 %v1001, %v1002
    %v1004 = vsel %vm927, %v977, 0.0
    %v1005 = vadd.f32 %v1003, %v1004
    %v1006 = vsel %vm927, %v978, 0.0
    %v1007 = vadd.f32 %v1005, %v1006
    %v1008 = vsel %vm927, %v979, 0.0
    %v1009 = vadd.f32 %v1007, %v1008
    %v1010 = vsel %vm927, %v980, 0.0
    %v1011 = vadd.f32 %v1009, %v1010
    %v1012 = vrot.slane %v1011, 4
    %v1013 = vadd.f32 %v1011, %v1012
    %v1014 = vrot.slane %v1013, 2
    %v1015 = vadd.f32 %v1013, %v1014
    %v1016 = vrot.slane %v1015, 1
    %v1017 = vadd.f32 %v1015, %v1016
    %v1018 = vmul.f32 %v895, %v895
    %v1019 = vmul.f32 %v896, %v896
    %v1020 = vmul.f32 %v897, %v897
    %v1021 = vmul.f32 %v898, %v898
    %v1022 = vmul.f32 %v899, %v899
    %v1023 = vmul.f32 %v900, %v900
    %v1024 = vmul.f32 %v901, %v901
    %v1025 = vmul.f32 %v902, %v902
    %v1026 = vmul.f32 %v903, %v903
    %v1027 = vmul.f32 %v904, %v904
    %v1028 = vmul.f32 %v905, %v905
    %v1029 = vmul.f32 %v906, %v906
    %v1030 = vmul.f32 %v907, %v907
    %v1031 = vmul.f32 %v908, %v908
    %v1032 = vmul.f32 %v909, %v909
    %v1033 = vmul.f32 %v910, %v910
    %v1034 = vsel %vm927, %v1018, 0.0
    %v1035 = vsel %vm927, %v1019, 0.0
    %v1036 = vadd.f32 %v1034, %v1035
    %v1037 = vsel %vm927, %v1020, 0.0
    %v1038 = vadd.f32 %v1036, %v1037
    %v1039 = vsel %vm927, %v1021, 0.0
    %v1040 = vadd.f32 %v1038, %v1039
    %v1041 = vsel %vm927, %v1022, 0.0
    %v1042 = vadd.f32 %v1040, %v1041
    %v1043 = vsel %vm927, %v1023, 0.0
    %v1044 = vadd.f32 %v1042, %v1043
    %v1045 = vsel %vm927, %v1024, 0.0
    %v1046 = vadd.f32 %v1044, %v1045
    %v1047 = vsel %vm927, %v1025, 0.0
    %v1048 = vadd.f32 %v1046, %v1047
    %v1049 = vsel %vm927, %v1026, 0.0
    %v1050 = vadd.f32 %v1048, %v1049
    %v1051 = vsel %vm927, %v1027, 0.0
    %v1052 = vadd.f32 %v1050, %v1051
    %v1053 = vsel %vm927, %v1028, 0.0
    %v1054 = vadd.f32 %v1052, %v1053
    %v1055 = vsel %vm927, %v1029, 0.0
    %v1056 = vadd.f32 %v1054, %v1055
    %v1057 = vsel %vm927, %v1030, 0.0
    %v1058 = vadd.f32 %v1056, %v1057
    %v1059 = vsel %vm927, %v1031, 0.0
    %v1060 = vadd.f32 %v1058, %v1059
    %v1061 = vsel %vm927, %v1032, 0.0
    %v1062 = vadd.f32 %v1060, %v1061
    %v1063 = vsel %vm927, %v1033, 0.0
    %v1064 = vadd.f32 %v1062, %v1063
    %v1065 = vrot.slane %v1064, 4
    %v1066 = vadd.f32 %v1064, %v1065
    %v1067 = vrot.slane %v1066, 2
    %v1068 = vadd.f32 %v1066, %v1067
    %v1069 = vrot.slane %v1068, 1
    %v1070 = vadd.f32 %v1068, %v1069
    %v1071 = vmul.f32 %v1017, %v1070
    %v1072 = vrsqrt.pop %v1071
    %v1073 = vmul.f32 %v1071, %v1072
    %vm1074 = vcmp.eq.f32.partialorder %v1071, inf
    %v1075 = vsel %vm1074, %v1071, %v1073
    %vm1076 = vcmp.eq.f32.partialorder %v1071, 0.0
    %v1077 = vand.u32 %v1071, 2147483648
    %v1078 = vsel %vm1076, %v1077, %v1075
    %v1079 = vadd.f32 %v1078, 1e-12
    %v1080 = vrcp.pop %v1079
    %v1081 = vmul.f32 %v964, %v1080
    %v1082 = vadd.f32 %v1081, 1.0
    %v1083 = vmul.f32 %v1082, 0.5
    %vm1084 = vcmask 57344
    %1085 = vst.msk [vmem:[#allocation2] sm:$0x1] %vm1084, %v1083
    // Predicated region
    $region30: #{tpu_custom_call.1} parent=1 // pred_check
      _
    $region31: #{tpu_custom_call.1} parent=1 // pred_check_branch
      %1087 = sbr.rel (0) target = $region33
    $region32: #{tpu_custom_call.1} parent=1 // pred_region
      %s1089 = ssub.s32 16, 16
      %1090 = vsyncadd [#allocation3], %s1089
      %s1092 = sshll.u32 [#allocation2], 4
      %s1093 = int_to_ptr.vmem [resolvable:$true] %s1092
      %1095 = dma.vmem_to_hbm [thread:$0]  %s1093, 16, %s7, [#allocation3]
    $region33: #{tpu_custom_call.1} parent=1 // pred_fallthru
      _
    // Predicated region
    $region34: #{tpu_custom_call.1} parent=1 // pred_check
      _
    $region35: #{tpu_custom_call.1} parent=1 // pred_check_branch
      %1097 = sbr.rel (0) target = $region37
    $region36: #{tpu_custom_call.1} parent=1 // pred_region
      %1098 = dma.done [#allocation3], 16
    $region37: #{tpu_custom_call.1} parent=1 // pred_fallthru
      _
    %1099 = vsyncpa [#allocation3], 1

</llo_original>
